<compile_context>
chip_gen: v6e
topology: v6e:2x2x1
jax: 0.10.0
libtpu: 0.0.40
codegen_flags: <defaults>
</compile_context>

<pallas_src>
import jax
import jax.numpy as jnp
from jax.experimental import pallas as pl
from jax.experimental.pallas import tpu as pltpu


# --------------------------- small in-kernel helper ---------------------------

def _pool_lanes(mat, width, pool):
    """Max over `pool` consecutive lane-blocks of size `width`."""
    out = mat[:, 0:width]
    for d in range(1, pool):
        out = jnp.maximum(out, mat[:, d * width:(d + 1) * width])
    return out


# ----------------------- one-time parameter preparation -----------------------

def _conv_pool_matrix(w_conv, w_in, pool, wp_out):
    """Build the block-structured conv+col-pool weight matrix.

    w_conv: PyTorch Conv2d weight (Co, Ci, kh, kw).
    Returns A of shape (k * w_in * Ci, pool * wp_out * Co) such that for an input
    row-tile X with X[h, w*Ci + ci] = x[h, w, ci] and
    XB[i, kh*(w_in*Ci) + w*Ci + ci] = X[i + kh, w*Ci + ci]:
        (XB @ A)[i, dx*(wp_out*Co) + jp*Co + co] = conv(x)[i, pool*jp + dx, co]  (no bias).
    """
    co_n, ci_n, k, _ = w_conv.shape
    w_pos = jnp.arange(w_in)
    dx_pos = jnp.arange(pool)
    jp_pos = jnp.arange(wp_out)
    # kw needed at (input col w, pool offset dx, pooled col jp)
    kw_idx = w_pos[:, None, None] - pool * jp_pos[None, None, :] - dx_pos[None, :, None]
    valid = (kw_idx >= 0) & (kw_idx < k)
    kw_clipped = jnp.clip(kw_idx, 0, k - 1)
    w_t = jnp.transpose(w_conv, (2, 1, 0, 3))              # (kh, Ci, Co, kw)
    gathered = w_t[:, :, :, kw_clipped]                    # (kh, Ci, Co, W, pool, Wp)
    gathered = gathered * valid[None, None, None].astype(w_conv.dtype)
    a6 = jnp.transpose(gathered, (0, 3, 1, 4, 5, 2))       # (kh, W, Ci, pool, Wp, Co)
    return a6.reshape(k * w_in * ci_n, pool * wp_out * co_n)


def prepare_params(params, input_shape, kernel_size=3, pool=2, eps=1e-5):
    """Fold BN (eval mode), flatten permutation and pool-column offsets into weights."""
    cin, h, w = input_shape
    k = kernel_size
    co1 = params["conv1_w"].shape[0]
    co2 = params["conv2_w"].shape[0]
    n_class = params["fc3_w"].shape[0]
    hp1, wp1 = (h - k + 1) // pool, (w - k + 1) // pool
    hp2, wp2 = (hp1 - k + 1) // pool, (wp1 - k + 1) // pool

    a1 = _conv_pool_matrix(params["conv1_w"], w, pool, wp1)     # (k*W*Cin, pool*Wp1*Co1)
    a2 = _conv_pool_matrix(params["conv2_w"], wp1, pool, wp2)   # (k*Wp1*Co1, pool*Wp2*Co2)

    # BatchNorm folding (eval mode): y = (x@W.T)*scale + shift
    s1 = params["bn1_g"] * jax.lax.rsqrt(params["bn1_v"] + eps)
    s2 = params["bn2_g"] * jax.lax.rsqrt(params["bn2_v"] + eps)
    b1f = params["bn1_b"] - params["bn1_m"] * s1
    b2f = params["bn2_b"] - params["bn2_m"] * s2

    # Kernel produces the flattened feature in (ip, jp, co) order; torch.flatten on
    # NCHW is (co, ip, jp). Fold the permutation into fc1's rows.
    perm = jnp.array([co * hp2 * wp2 + ip * wp2 + jp
                      for ip in range(hp2) for jp in range(wp2) for co in range(co2)],
                     dtype=jnp.int32)
    w1 = (params["fc1_w"].T * s1[None, :])[perm, :]             # (hp2*wp2*co2, 120)
    w2 = params["fc2_w"].T * s2[None, :]                        # (120, 84)
    w3 = params["fc3_w"].T                                      # (84, n_class)
    d1, d2 = w1.shape[1], w2.shape[1]

    # All biases in one lane-padded f32 tile: one DMA instead of five tiny ones.
    bw = -(-max(wp1 * co1, wp2 * co2, d1, d2, n_class) // 128) * 128
    biases = jnp.zeros((5, bw), jnp.float32)
    biases = biases.at[0, :wp1 * co1].set(jnp.tile(params["conv1_b"], wp1))
    biases = biases.at[1, :wp2 * co2].set(jnp.tile(params["conv2_b"], wp2))
    biases = biases.at[2, :d1].set(b1f)
    biases = biases.at[3, :d2].set(b2f)
    biases = biases.at[4, :n_class].set(params["fc3_b"])

    return {
        "a1": a1.astype(jnp.bfloat16),
        "a2": a2.astype(jnp.bfloat16),
        "w1": w1.astype(jnp.bfloat16),
        "w2": w2.astype(jnp.bfloat16),
        "w3": w3.astype(jnp.bfloat16),
        "biases": biases,
    }


# --------------------------------- forward -----------------------------------

def cnn_forward(prepared, x_nchw, kernel_size=3, pool=2):
    k = kernel_size
    b, cin, h, w = x_nchw.shape
    a1, a2 = prepared["a1"], prepared["a2"]
    w1, w2, w3 = prepared["w1"], prepared["w2"], prepared["w3"]
    biases = prepared["biases"]
    n_class = w3.shape[1]
    d1, d2 = w1.shape[1], w2.shape[1]
    hp1, wp1 = (h - k + 1) // pool, (w - k + 1) // pool
    hp2, wp2 = (hp1 - k + 1) // pool, (wp1 - k + 1) // pool
    co1 = a1.shape[1] // (pool * wp1)
    co2 = a2.shape[1] // (pool * wp2)
    assert pool == 2 and h % 2 == 0, "fused kernel assumes pool=2 and even input height"
    use_softmax = n_class > 1

    # NCHW -> NHWC -> (B, 2, H//2, W*Cin): lanes are w*Cin+ci, rows even/odd
    # de-interleaved so the 2x2 pool row-offsets become two plain matmuls in-kernel.
    x = jnp.transpose(x_nchw, (0, 2, 3, 1)).astype(jnp.float32).reshape(b, h, w * cin)
    x = x.reshape(b, h // 2, 2, w * cin).transpose(0, 2, 1, 3)

    def _whole(arr):
        nd = arr.ndim
        return pl.BlockSpec(arr.shape, lambda i: (0,) * nd)

    def kernel(x_ref, a1_ref, a2_ref, w1_ref, w2_ref, w3_ref, b_ref, o_ref):
        f32, bf16 = jnp.float32, jnp.bfloat16

        # ---- conv1 + ReLU + MaxPool(2) ------------------------------------
        # x_ref: (2, H//2, W*Cin); x_ref[p, q, :] = input row 2q+p.
        taps_e, taps_o = [], []
        for kh in range(k):
            taps_e.append(x_ref[kh % 2, pl.ds(kh // 2, hp1), :])            # conv rows 2q
            taps_o.append(x_ref[(kh + 1) % 2, pl.ds((kh + 1) // 2, hp1), :])  # rows 2q+1
        xb_e = jnp.concatenate(taps_e, axis=1).astype(bf16)   # (hp1, k*W*Cin)
        xb_o = jnp.concatenate(taps_o, axis=1).astype(bf16)
        a1v = a1_ref[...]
        s_e = jnp.dot(xb_e, a1v, preferred_element_type=f32)  # (hp1, pool*wp1*co1)
        s_o = jnp.dot(xb_o, a1v, preferred_element_type=f32)
        m1 = jnp.maximum(s_e, s_o)                            # max over pool-row offsets
        m1 = _pool_lanes(m1, wp1 * co1, pool)                 # max over pool-col offsets
        y1 = jnp.maximum(m1 + b_ref[pl.ds(0, 1), pl.ds(0, wp1 * co1)], 0.0)  # (hp1, wp1*co1)

        # ---- conv2 + ReLU + MaxPool(2) ------------------------------------
        nrow2 = pool * hp2                                    # conv rows surviving pooling
        xb2 = jnp.concatenate([y1[kh:kh + nrow2, :] for kh in range(k)],
                              axis=1).astype(bf16)            # (nrow2, k*wp1*co1)
        s2 = jnp.dot(xb2, a2_ref[...], preferred_element_type=f32)  # (nrow2, pool*wp2*co2)
        rows = []
        for ip in range(hp2):
            r = s2[pool * ip:pool * ip + 1, :]
            for d in range(1, pool):
                r = jnp.maximum(r, s2[pool * ip + d:pool * ip + d + 1, :])
            rows.append(r)
        m2 = rows[0] if hp2 == 1 else jnp.concatenate(rows, axis=0)
        m2 = _pool_lanes(m2, wp2 * co2, pool)
        y2 = jnp.maximum(m2 + b_ref[pl.ds(1, 1), pl.ds(0, wp2 * co2)], 0.0)  # (hp2, wp2*co2)

        # ---- flatten (NCHW permutation folded into w1) ---------------------
        feat = (y2[0:1, :] if hp2 == 1 else
                jnp.concatenate([y2[ip:ip + 1, :] for ip in range(hp2)], axis=1))

        # ---- MLP head: (Linear+BN+ReLU) x2 -> Linear, BN folded ------------
        hdn = jnp.dot(feat.astype(bf16), w1_ref[...], preferred_element_type=f32)
        hdn = jnp.maximum(hdn + b_ref[pl.ds(2, 1), pl.ds(0, d1)], 0.0)
        hdn = jnp.dot(hdn.astype(bf16), w2_ref[...], preferred_element_type=f32)
        hdn = jnp.maximum(hdn + b_ref[pl.ds(3, 1), pl.ds(0, d2)], 0.0)
        logits = jnp.dot(hdn.astype(bf16), w3_ref[...], preferred_element_type=f32)
        logits = logits + b_ref[pl.ds(4, 1), pl.ds(0, n_class)]

        if use_softmax:
            z = logits - jnp.max(logits, axis=1, keepdims=True)
            e = jnp.exp(z)
            probs = e * pl.reciprocal(jnp.sum(e, axis=1, keepdims=True), approx=True)
        else:
            probs = pl.reciprocal(1.0 + jnp.exp(-logits), approx=True)
        o_ref[0] = probs

    out = pl.pallas_call(
        kernel,
        grid=(b,),
        in_specs=[
            pl.BlockSpec((None, 2, h // 2, w * cin), lambda i: (i, 0, 0, 0)),
            _whole(a1), _whole(a2), _whole(w1), _whole(w2), _whole(w3), _whole(biases),
        ],
        out_specs=pl.BlockSpec((1, 1, n_class), lambda i: (i, 0, 0)),
        out_shape=jax.ShapeDtypeStruct((b, 1, n_class), jnp.float32),
        compiler_params=pltpu.CompilerParams(dimension_semantics=("parallel",)),
    )(x, a1, a2, w1, w2, w3, biases)
    return out.reshape(b, n_class)


# --------------------------- parameter creation ---------------------------

def init_cnn_params(key, input_shape, n_class, n_kern=6, n_kern2=20, kernel_size=3):
    cin = input_shape[0]
    h = ((input_shape[1] - kernel_size + 1) // 2 - kernel_size + 1) // 2
    w = ((input_shape[2] - kernel_size + 1) // 2 - kernel_size + 1) // 2
    flat = n_kern2 * h * w
    hidden = [flat, 120, 84]

    def uinit(k, shape, fan_in):
        bound = 1.0 / jnp.sqrt(jnp.float32(fan_in))
        return jax.random.uniform(k, shape, jnp.float32, -bound, bound)

    keys = jax.random.split(key, 16)
    p = {}
    p["conv1_w"] = uinit(keys[0], (n_kern, cin, kernel_size, kernel_size),
                         cin * kernel_size * kernel_size)
    p["conv1_b"] = uinit(keys[1], (n_kern,), cin * kernel_size * kernel_size)
    p["conv2_w"] = uinit(keys[2], (n_kern2, n_kern, kernel_size, kernel_size),
                         n_kern * kernel_size * kernel_size)
    p["conv2_b"] = uinit(keys[3], (n_kern2,), n_kern * kernel_size * kernel_size)

    p["fc1_w"] = uinit(keys[4], (hidden[1], hidden[0]), hidden[0])   # Linear (out,in), no bias
    p["bn1_g"] = 1.0 + 0.1 * jax.random.normal(keys[5], (hidden[1],), jnp.float32)
    p["bn1_b"] = 0.1 * jax.random.normal(keys[6], (hidden[1],), jnp.float32)
    p["bn1_m"] = 0.1 * jax.random.normal(keys[7], (hidden[1],), jnp.float32)
    p["bn1_v"] = jax.random.uniform(keys[8], (hidden[1],), jnp.float32, 0.5, 1.5)

    p["fc2_w"] = uinit(keys[9], (hidden[2], hidden[1]), hidden[1])
    p["bn2_g"] = 1.0 + 0.1 * jax.random.normal(keys[10], (hidden[2],), jnp.float32)
    p["bn2_b"] = 0.1 * jax.random.normal(keys[11], (hidden[2],), jnp.float32)
    p["bn2_m"] = 0.1 * jax.random.normal(keys[12], (hidden[2],), jnp.float32)
    p["bn2_v"] = jax.random.uniform(keys[13], (hidden[2],), jnp.float32, 0.5, 1.5)

    p["fc3_w"] = uinit(keys[14], (n_class, hidden[2]), hidden[2])
    p["fc3_b"] = uinit(keys[15], (n_class,), hidden[2])
    return p


# ----------------------------------- main ----------------------------------

if __name__ == "__main__":
    key = jax.random.PRNGKey(0)
    k_param, k_x = jax.random.split(key)

    input_shape = (4, 16, 16)   # (C, H, W)
    n_class = 10
    batch = 2

    params = init_cnn_params(k_param, input_shape, n_class)
    prepared = prepare_params(params, input_shape)          # one-time weight folding
    x = jax.random.normal(k_x, (batch,) + input_shape, jnp.float32)  # NCHW

    out = jax.jit(cnn_forward)(prepared, x)
    out = jax.block_until_ready(out)

    assert out.shape == (batch, n_class)
    print("KERNEL_OK")
</pallas_src>

<mosaic_0001>
module attributes {stable_mosaic.version = 11 : i64} {
  func.func @kernel(%arg0: i32, %arg1: memref<1x2x8x64xf32, #tpu.memory_space<vmem>>, %arg2: memref<192x84xbf16, #tpu.memory_space<vmem>>, %arg3: memref<126x80xbf16, #tpu.memory_space<vmem>>, %arg4: memref<80x120xbf16, #tpu.memory_space<vmem>>, %arg5: memref<120x84xbf16, #tpu.memory_space<vmem>>, %arg6: memref<84x10xbf16, #tpu.memory_space<vmem>>, %arg7: memref<5x128xf32, #tpu.memory_space<vmem>>, %arg8: memref<1x1x10xf32, #tpu.memory_space<vmem>>) attributes {dimension_semantics = [#tpu.dimension_semantics<parallel>], iteration_bounds = array<i64: 2>, scalar_prefetch = 0 : i64, scratch_operands = 0 : i64, tpu.core_type = #tpu.core_type<tc>, window_params = [{transform_indices = @transform_0, window_bounds = array<i64: 1, 2, 8, 64>}, {pipeline_mode = #tpu.pipeline_mode<synchronous>, transform_indices = @transform_1, window_bounds = array<i64: 192, 84>}, {pipeline_mode = #tpu.pipeline_mode<synchronous>, transform_indices = @transform_2, window_bounds = array<i64: 126, 80>}, {pipeline_mode = #tpu.pipeline_mode<synchronous>, transform_indices = @transform_3, window_bounds = array<i64: 80, 120>}, {pipeline_mode = #tpu.pipeline_mode<synchronous>, transform_indices = @transform_4, window_bounds = array<i64: 120, 84>}, {pipeline_mode = #tpu.pipeline_mode<synchronous>, transform_indices = @transform_5, window_bounds = array<i64: 84, 10>}, {pipeline_mode = #tpu.pipeline_mode<synchronous>, transform_indices = @transform_6, window_bounds = array<i64: 5, 128>}, {transform_indices = @transform_7, window_bounds = array<i64: 1, 1, 10>}]} {
    %c0 = arith.constant 0 : index
    %c0_0 = arith.constant 0 : index
    %c0_1 = arith.constant 0 : index
    %c0_2 = arith.constant 0 : index
    %0 = vector.load %arg1[%c0, %c0_0, %c0_1, %c0_2] : memref<1x2x8x64xf32, #tpu.memory_space<vmem>>, vector<1x1x7x64xf32>
    %1 = vector.shape_cast %0 : vector<1x1x7x64xf32> to vector<7x64xf32>
    %c0_3 = arith.constant 0 : index
    %c1 = arith.constant 1 : index
    %c0_4 = arith.constant 0 : index
    %c0_5 = arith.constant 0 : index
    %2 = vector.load %arg1[%c0_3, %c1, %c0_4, %c0_5] : memref<1x2x8x64xf32, #tpu.memory_space<vmem>>, vector<1x1x7x64xf32>
    %3 = vector.shape_cast %2 : vector<1x1x7x64xf32> to vector<7x64xf32>
    %c0_6 = arith.constant 0 : index
    %c1_7 = arith.constant 1 : index
    %c0_8 = arith.constant 0 : index
    %c0_9 = arith.constant 0 : index
    %4 = vector.load %arg1[%c0_6, %c1_7, %c0_8, %c0_9] : memref<1x2x8x64xf32, #tpu.memory_space<vmem>>, vector<1x1x7x64xf32>
    %5 = vector.shape_cast %4 : vector<1x1x7x64xf32> to vector<7x64xf32>
    %c0_10 = arith.constant 0 : index
    %c0_11 = arith.constant 0 : index
    %c1_12 = arith.constant 1 : index
    %c0_13 = arith.constant 0 : index
    %6 = vector.load %arg1[%c0_10, %c0_11, %c1_12, %c0_13] : memref<1x2x8x64xf32, #tpu.memory_space<vmem>>, vector<1x1x7x64xf32>
    %7 = vector.shape_cast %6 : vector<1x1x7x64xf32> to vector<7x64xf32>
    %c0_14 = arith.constant 0 : index
    %c0_15 = arith.constant 0 : index
    %c1_16 = arith.constant 1 : index
    %c0_17 = arith.constant 0 : index
    %8 = vector.load %arg1[%c0_14, %c0_15, %c1_16, %c0_17] : memref<1x2x8x64xf32, #tpu.memory_space<vmem>>, vector<1x1x7x64xf32>
    %9 = vector.shape_cast %8 : vector<1x1x7x64xf32> to vector<7x64xf32>
    %c0_18 = arith.constant 0 : index
    %c1_19 = arith.constant 1 : index
    %c1_20 = arith.constant 1 : index
    %c0_21 = arith.constant 0 : index
    %10 = vector.load %arg1[%c0_18, %c1_19, %c1_20, %c0_21] : memref<1x2x8x64xf32, #tpu.memory_space<vmem>>, vector<1x1x7x64xf32>
    %11 = vector.shape_cast %10 : vector<1x1x7x64xf32> to vector<7x64xf32>
    %12 = tpu.concatenate %1, %5, %9 in 1 : vector<7x64xf32>, vector<7x64xf32>, vector<7x64xf32> -> vector<7x192xf32>
    %13 = arith.truncf %12 : vector<7x192xf32> to vector<7x192xbf16>
    %14 = tpu.concatenate %3, %7, %11 in 1 : vector<7x64xf32>, vector<7x64xf32>, vector<7x64xf32> -> vector<7x192xf32>
    %15 = arith.truncf %14 : vector<7x192xf32> to vector<7x192xbf16>
    %c0_22 = arith.constant 0 : index
    %c0_23 = arith.constant 0 : index
    %16 = vector.load %arg2[%c0_22, %c0_23] : memref<192x84xbf16, #tpu.memory_space<vmem>>, vector<192x84xbf16>
    %cst = arith.constant dense<0.000000e+00> : vector<7x84xf32>
    %17 = tpu.matmul %13, %16, %cst {dimension_numbers = #tpu.dot_dimension_numbers<[1], [0], [0], [1], [0, 0, 1, 1], [], []>} : vector<7x192xbf16>, vector<192x84xbf16>, vector<7x84xf32> -> vector<7x84xf32>
    %cst_24 = arith.constant dense<0.000000e+00> : vector<7x84xf32>
    %18 = tpu.matmul %15, %16, %cst_24 {dimension_numbers = #tpu.dot_dimension_numbers<[1], [0], [0], [1], [0, 0, 1, 1], [], []>} : vector<7x192xbf16>, vector<192x84xbf16>, vector<7x84xf32> -> vector<7x84xf32>
    %19 = arith.maximumf %17, %18 : vector<7x84xf32>
    %20 = vector.extract_strided_slice %19 {offsets = [0, 0], sizes = [7, 42], strides = [1, 1]} : vector<7x84xf32> to vector<7x42xf32>
    %21 = vector.extract_strided_slice %19 {offsets = [0, 42], sizes = [7, 42], strides = [1, 1]} : vector<7x84xf32> to vector<7x42xf32>
    %22 = arith.maximumf %20, %21 : vector<7x42xf32>
    %c0_25 = arith.constant 0 : index
    %c0_26 = arith.constant 0 : index
    %23 = vector.load %arg7[%c0_25, %c0_26] : memref<5x128xf32, #tpu.memory_space<vmem>>, vector<1x42xf32>
    %24 = vector.broadcast %23 : vector<1x42xf32> to vector<7x42xf32>
    %25 = arith.addf %22, %24 : vector<7x42xf32>
    %cst_27 = arith.constant 0.000000e+00 : f32
    %26 = vector.broadcast %cst_27 : f32 to vector<7x42xf32>
    %27 = arith.maximumf %25, %26 : vector<7x42xf32>
    %28 = vector.extract_strided_slice %27 {offsets = [0, 0], sizes = [4, 42], strides = [1, 1]} : vector<7x42xf32> to vector<4x42xf32>
    %29 = vector.extract_strided_slice %27 {offsets = [1, 0], sizes = [4, 42], strides = [1, 1]} : vector<7x42xf32> to vector<4x42xf32>
    %30 = vector.extract_strided_slice %27 {offsets = [2, 0], sizes = [4, 42], strides = [1, 1]} : vector<7x42xf32> to vector<4x42xf32>
    %31 = tpu.concatenate %28, %29, %30 in 1 : vector<4x42xf32>, vector<4x42xf32>, vector<4x42xf32> -> vector<4x126xf32>
    %32 = arith.truncf %31 : vector<4x126xf32> to vector<4x126xbf16>
    %c0_28 = arith.constant 0 : index
    %c0_29 = arith.constant 0 : index
    %33 = vector.load %arg3[%c0_28, %c0_29] : memref<126x80xbf16, #tpu.memory_space<vmem>>, vector<126x80xbf16>
    %cst_30 = arith.constant dense<0.000000e+00> : vector<4x80xf32>
    %34 = tpu.matmul %32, %33, %cst_30 {dimension_numbers = #tpu.dot_dimension_numbers<[1], [0], [0], [1], [0, 0, 1, 1], [], []>} : vector<4x126xbf16>, vector<126x80xbf16>, vector<4x80xf32> -> vector<4x80xf32>
    %35 = vector.extract_strided_slice %34 {offsets = [0, 0], sizes = [1, 80], strides = [1, 1]} : vector<4x80xf32> to vector<1x80xf32>
    %36 = vector.extract_strided_slice %34 {offsets = [1, 0], sizes = [1, 80], strides = [1, 1]} : vector<4x80xf32> to vector<1x80xf32>
    %37 = arith.maximumf %35, %36 : vector<1x80xf32>
    %38 = vector.extract_strided_slice %34 {offsets = [2, 0], sizes = [1, 80], strides = [1, 1]} : vector<4x80xf32> to vector<1x80xf32>
    %39 = vector.extract_strided_slice %34 {offsets = [3, 0], sizes = [1, 80], strides = [1, 1]} : vector<4x80xf32> to vector<1x80xf32>
    %40 = arith.maximumf %38, %39 : vector<1x80xf32>
    %41 = tpu.concatenate %37, %40 in 0 : vector<1x80xf32>, vector<1x80xf32> -> vector<2x80xf32>
    %42 = vector.extract_strided_slice %41 {offsets = [0, 0], sizes = [2, 40], strides = [1, 1]} : vector<2x80xf32> to vector<2x40xf32>
    %43 = vector.extract_strided_slice %41 {offsets = [0, 40], sizes = [2, 40], strides = [1, 1]} : vector<2x80xf32> to vector<2x40xf32>
    %44 = arith.maximumf %42, %43 : vector<2x40xf32>
    %c1_31 = arith.constant 1 : index
    %c0_32 = arith.constant 0 : index
    %45 = vector.load %arg7[%c1_31, %c0_32] : memref<5x128xf32, #tpu.memory_space<vmem>>, vector<1x40xf32>
    %46 = vector.broadcast %45 : vector<1x40xf32> to vector<2x40xf32>
    %47 = arith.addf %44, %46 : vector<2x40xf32>
    %cst_33 = arith.constant 0.000000e+00 : f32
    %48 = vector.broadcast %cst_33 : f32 to vector<2x40xf32>
    %49 = arith.maximumf %47, %48 : vector<2x40xf32>
    %50 = vector.extract_strided_slice %49 {offsets = [0, 0], sizes = [1, 40], strides = [1, 1]} : vector<2x40xf32> to vector<1x40xf32>
    %51 = vector.extract_strided_slice %49 {offsets = [1, 0], sizes = [1, 40], strides = [1, 1]} : vector<2x40xf32> to vector<1x40xf32>
    %52 = tpu.concatenate %50, %51 in 1 : vector<1x40xf32>, vector<1x40xf32> -> vector<1x80xf32>
    %53 = arith.truncf %52 : vector<1x80xf32> to vector<1x80xbf16>
    %c0_34 = arith.constant 0 : index
    %c0_35 = arith.constant 0 : index
    %54 = vector.load %arg4[%c0_34, %c0_35] : memref<80x120xbf16, #tpu.memory_space<vmem>>, vector<80x120xbf16>
    %cst_36 = arith.constant dense<0.000000e+00> : vector<1x120xf32>
    %55 = tpu.matmul %53, %54, %cst_36 {dimension_numbers = #tpu.dot_dimension_numbers<[1], [0], [0], [1], [0, 0, 1, 1], [], []>} : vector<1x80xbf16>, vector<80x120xbf16>, vector<1x120xf32> -> vector<1x120xf32>
    %c2 = arith.constant 2 : index
    %c0_37 = arith.constant 0 : index
    %56 = vector.load %arg7[%c2, %c0_37] : memref<5x128xf32, #tpu.memory_space<vmem>>, vector<1x120xf32>
    %57 = arith.addf %55, %56 : vector<1x120xf32>
    %cst_38 = arith.constant 0.000000e+00 : f32
    %58 = vector.broadcast %cst_38 : f32 to vector<1x120xf32>
    %59 = arith.maximumf %57, %58 : vector<1x120xf32>
    %60 = arith.truncf %59 : vector<1x120xf32> to vector<1x120xbf16>
    %c0_39 = arith.constant 0 : index
    %c0_40 = arith.constant 0 : index
    %61 = vector.load %arg5[%c0_39, %c0_40] : memref<120x84xbf16, #tpu.memory_space<vmem>>, vector<120x84xbf16>
    %cst_41 = arith.constant dense<0.000000e+00> : vector<1x84xf32>
    %62 = tpu.matmul %60, %61, %cst_41 {dimension_numbers = #tpu.dot_dimension_numbers<[1], [0], [0], [1], [0, 0, 1, 1], [], []>} : vector<1x120xbf16>, vector<120x84xbf16>, vector<1x84xf32> -> vector<1x84xf32>
    %c3 = arith.constant 3 : index
    %c0_42 = arith.constant 0 : index
    %63 = vector.load %arg7[%c3, %c0_42] : memref<5x128xf32, #tpu.memory_space<vmem>>, vector<1x84xf32>
    %64 = arith.addf %62, %63 : vector<1x84xf32>
    %cst_43 = arith.constant 0.000000e+00 : f32
    %65 = vector.broadcast %cst_43 : f32 to vector<1x84xf32>
    %66 = arith.maximumf %64, %65 : vector<1x84xf32>
    %67 = arith.truncf %66 : vector<1x84xf32> to vector<1x84xbf16>
    %c0_44 = arith.constant 0 : index
    %c0_45 = arith.constant 0 : index
    %68 = vector.load %arg6[%c0_44, %c0_45] : memref<84x10xbf16, #tpu.memory_space<vmem>>, vector<84x10xbf16>
    %cst_46 = arith.constant dense<0.000000e+00> : vector<1x10xf32>
    %69 = tpu.matmul %67, %68, %cst_46 {dimension_numbers = #tpu.dot_dimension_numbers<[1], [0], [0], [1], [0, 0, 1, 1], [], []>} : vector<1x84xbf16>, vector<84x10xbf16>, vector<1x10xf32> -> vector<1x10xf32>
    %c4 = arith.constant 4 : index
    %c0_47 = arith.constant 0 : index
    %70 = vector.load %arg7[%c4, %c0_47] : memref<5x128xf32, #tpu.memory_space<vmem>>, vector<1x10xf32>
    %71 = arith.addf %69, %70 : vector<1x10xf32>
    %cst_48 = arith.constant dense<0xFF800000> : vector<1xf32>
    %72 = vector.multi_reduction <maximumf>, %71, %cst_48 [1] : vector<1x10xf32> to vector<1xf32>
    %73 = vector.shape_cast %72 : vector<1xf32> to vector<1x1xf32>
    %74 = vector.broadcast %73 : vector<1x1xf32> to vector<1x10xf32>
    %75 = arith.subf %71, %74 : vector<1x10xf32>
    %76 = math.exp %75 : vector<1x10xf32>
    %cst_49 = arith.constant dense<0.000000e+00> : vector<1xf32>
    %77 = vector.multi_reduction <add>, %76, %cst_49 [1] : vector<1x10xf32> to vector<1xf32>
    %78 = vector.shape_cast %77 : vector<1xf32> to vector<1x1xf32>
    %79 = tpu.reciprocal %78 {approx = true} : vector<1x1xf32> -> vector<1x1xf32>
    %80 = vector.broadcast %79 : vector<1x1xf32> to vector<1x10xf32>
    %81 = arith.mulf %76, %80 : vector<1x10xf32>
    %c0_50 = arith.constant 0 : index
    %c0_51 = arith.constant 0 : index
    %c0_52 = arith.constant 0 : index
    %82 = vector.load %arg8[%c0_50, %c0_51, %c0_52] : memref<1x1x10xf32, #tpu.memory_space<vmem>>, vector<1x1x10xf32>
    %83 = vector.shape_cast %82 : vector<1x1x10xf32> to vector<1x10xf32>
    %84 = vector.shape_cast %81 : vector<1x10xf32> to vector<1x1x10xf32>
    tpu.vector_store %arg8[%c0_50, %c0_51, %c0_52], %84 {strides = array<i32>} : memref<1x1x10xf32, #tpu.memory_space<vmem>>, vector<1x1x10xf32>,
    return
  }
  func.func @transform_0(%arg0: i32) -> (i32, i32, i32, i32) {
    %c0_i32 = arith.constant 0 : i32
    %c0_i32_0 = arith.constant 0 : i32
    %c0_i32_1 = arith.constant 0 : i32
    %c0_i32_2 = arith.constant 0 : i32
    return %arg0, %c0_i32, %c0_i32_0, %c0_i32_1 : i32, i32, i32, i32
  }
  func.func @transform_1(%arg0: i32) -> (i32, i32) {
    %c0_i32 = arith.constant 0 : i32
    %c0_i32_0 = arith.constant 0 : i32
    %c0_i32_1 = arith.constant 0 : i32
    return %c0_i32, %c0_i32_0 : i32, i32
  }
  func.func @transform_2(%arg0: i32) -> (i32, i32) {
    %c0_i32 = arith.constant 0 : i32
    %c0_i32_0 = arith.constant 0 : i32
    %c0_i32_1 = arith.constant 0 : i32
    return %c0_i32, %c0_i32_0 : i32, i32
  }
  func.func @transform_3(%arg0: i32) -> (i32, i32) {
    %c0_i32 = arith.constant 0 : i32
    %c0_i32_0 = arith.constant 0 : i32
    %c0_i32_1 = arith.constant 0 : i32
    return %c0_i32, %c0_i32_0 : i32, i32
  }
  func.func @transform_4(%arg0: i32) -> (i32, i32) {
    %c0_i32 = arith.constant 0 : i32
    %c0_i32_0 = arith.constant 0 : i32
    %c0_i32_1 = arith.constant 0 : i32
    return %c0_i32, %c0_i32_0 : i32, i32
  }
  func.func @transform_5(%arg0: i32) -> (i32, i32) {
    %c0_i32 = arith.constant 0 : i32
    %c0_i32_0 = arith.constant 0 : i32
    %c0_i32_1 = arith.constant 0 : i32
    return %c0_i32, %c0_i32_0 : i32, i32
  }
  func.func @transform_6(%arg0: i32) -> (i32, i32) {
    %c0_i32 = arith.constant 0 : i32
    %c0_i32_0 = arith.constant 0 : i32
    %c0_i32_1 = arith.constant 0 : i32
    return %c0_i32, %c0_i32_0 : i32, i32
  }
  func.func @transform_7(%arg0: i32) -> (i32, i32, i32) {
    %c0_i32 = arith.constant 0 : i32
    %c0_i32_0 = arith.constant 0 : i32
    %c0_i32_1 = arith.constant 0 : i32
    return %arg0, %c0_i32, %c0_i32_0 : i32, i32, i32
  }
}

</mosaic_0001>

<llo_original>
// kernel: cnn_forward.1
$region0: #{cnn_forward.1}
  #allocation0 [shape = 'u32[]', space=smem, size = 0x4, offset = 0x4, fixed_abs, tag = 'smem constant byte address 0x4 - core index']
  #allocation1 [shape = 'u32[144,128]{1,0:T(1,128)}', space=vmem, size = 0x12000, scoped, tag = 'internal scratch']
  %s0 = inlined_call_operand.vmem [shape: f32[2,2,8,64], index: 0, kind: input, shape index: {}]
  %s1 = inlined_call_operand.vmem [shape: bf16[192,84], index: 1, kind: input, shape index: {}]
  %s2 = inlined_call_operand.vmem [shape: bf16[126,80], index: 2, kind: input, shape index: {}]
  %s3 = inlined_call_operand.vmem [shape: bf16[80,120], index: 3, kind: input, shape index: {}]
  %s4 = inlined_call_operand.vmem [shape: bf16[120,84], index: 4, kind: input, shape index: {}]
  %s5 = inlined_call_operand.vmem [shape: bf16[84,10], index: 5, kind: input, shape index: {}]
  %s6 = inlined_call_operand.vmem [shape: f32[5,128], index: 6, kind: input, shape index: {}]
  %s7 = inlined_call_operand.hbm [shape: f32[2,1,10], index: 7, kind: output, shape index: {}]
  %s8 = sld [smem:[#allocation0]]
  $region61: #{cnn_forward.1} parent=0
    _
  %s10 = ssub.s32 1, %s8
  %s11 = scalar_select 0, %s10, %s8
  $region1: #{cnn_forward.1} parent=0
    #allocation2 [shape = 'u8[1024]{0}', space=vmem, size = 0x400, scoped, tag = 'output window, operand 0']
    #allocation3 [shape = 's32[2]{0}', space=sflag, size = 0x8, scoped, tag = 'scoped memory for cnn_forward.1']
    %12 = vsyncpa [#allocation3], 0
    %s13 = scalar_lea.sflag [#allocation3], 1
    %14 = vsyncpa %s13, 0
    loop: start=0, step=1, limit=4
    $region2: #{cnn_forward.1} parent=1 // loop_pre_header
      _
    $region3: #{cnn_forward.1} parent=1 // loop_header
      %s16 = sphi 0, %s20
      %p17 = scmp.ge.s32.totalorder %s16, 4
      %s26 = sphi 0, %s28
      %s29 = sphi 0, %s26
      %s30 = sphi 0, %s29
      %s46 = sphi 0, %s30
      %s50 = sphi 0, %s50
      %s52 = sphi 0, %s50
      %s53 = sphi 0, %s52
      %s67 = sphi 0, %s53
      %s71 = sphi 0, %s71
      %s73 = sphi 0, %s71
      %s74 = sphi 0, %s73
      %s88 = sphi 0, %s74
      %s92 = sphi 0, %s92
      %s94 = sphi 0, %s92
      %s95 = sphi 0, %s94
      %s109 = sphi 0, %s95
      %s113 = sphi 0, %s113
      %s115 = sphi 0, %s113
      %s116 = sphi 0, %s115
      %s130 = sphi 0, %s116
      %s134 = sphi 0, %s134
      %s136 = sphi 0, %s134
      %s137 = sphi 0, %s136
      %s151 = sphi 0, %s137
      %s155 = sphi 0, %s155
      %s157 = sphi 0, %s155
      %s158 = sphi 0, %s157
      %s172 = sphi 0, %s158
      %s178 = sphi 0, %s180
      %s181 = sphi 0, %s178
      %s182 = sphi 0, %s181
      %s198 = sphi 0, %s182
    $region4: #{cnn_forward.1} parent=1 // loop_header_branch
      %19 = sbr.rel (%p17) target = $region8
    $region5: #{cnn_forward.1} parent=1 // loop_body
      %s21 = ssub.s32 %s16, 1
      %s22 = ssub.s32 %s16, 2
      %s23 = sadd.s32 %s16, 1
      %s24 = ssub.s32 %s16, %s23
      %p25 = scmp.eq.s32.totalorder %s24, 0
      %s27 = sadd.s32 %s26, 1
      %s28 = scalar_select %p25, %s26, %s27
      %p31 = pneg %p25
      %p32 = scmp.eq.s32.totalorder %s16, 1
      %p33 = por %p31, %p32
      %p34 = scmp.ne.s32.totalorder %s26, %s29
      %p35 = scmp.eq.s32.totalorder %s16, 0
      %p36 = por %p34, %p35
      %p37 = scmp.ne.s32.totalorder %s26, %s29
      %p38 = scmp.eq.s32.totalorder %s21, 1
      %p39 = por %p37, %p38
      %p40 = scmp.ne.s32.totalorder %s29, %s30
      %p41 = scmp.eq.s32.totalorder %s21, 0
      %p42 = por %p40, %p41
      %p43 = scmp.ne.s32.totalorder %s29, %s30
      %p44 = scmp.eq.s32.totalorder %s22, 1
      %p45 = por %p43, %p44
      %p47 = scmp.ne.s32.totalorder %s30, %s46
      %p48 = scmp.eq.s32.totalorder %s22, 0
      %p49 = por %p47, %p48
      %s51 = sadd.s32 %s50, 1
      %p54 = scmp.eq.s32.totalorder %s16, 1
      %p55 = scmp.ne.s32.totalorder %s50, %s52
      %p56 = scmp.eq.s32.totalorder %s16, 0
      %p57 = por %p55, %p56
      %p58 = scmp.ne.s32.totalorder %s50, %s52
      %p59 = scmp.eq.s32.totalorder %s21, 1
      %p60 = por %p58, %p59
      %p61 = scmp.ne.s32.totalorder %s52, %s53
      %p62 = scmp.eq.s32.totalorder %s21, 0
      %p63 = por %p61, %p62
      %p64 = scmp.ne.s32.totalorder %s52, %s53
      %p65 = scmp.eq.s32.totalorder %s22, 1
      %p66 = por %p64, %p65
      %p68 = scmp.ne.s32.totalorder %s53, %s67
      %p69 = scmp.eq.s32.totalorder %s22, 0
      %p70 = por %p68, %p69
      %s72 = sadd.s32 %s71, 1
      %p75 = scmp.eq.s32.totalorder %s16, 1
      %p76 = scmp.ne.s32.totalorder %s71, %s73
      %p77 = scmp.eq.s32.totalorder %s16, 0
      %p78 = por %p76, %p77
      %p79 = scmp.ne.s32.totalorder %s71, %s73
      %p80 = scmp.eq.s32.totalorder %s21, 1
      %p81 = por %p79, %p80
      %p82 = scmp.ne.s32.totalorder %s73, %s74
      %p83 = scmp.eq.s32.totalorder %s21, 0
      %p84 = por %p82, %p83
      %p85 = scmp.ne.s32.totalorder %s73, %s74
      %p86 = scmp.eq.s32.totalorder %s22, 1
      %p87 = por %p85, %p86
      %p89 = scmp.ne.s32.totalorder %s74, %s88
      %p90 = scmp.eq.s32.totalorder %s22, 0
      %p91 = por %p89, %p90
      %s93 = sadd.s32 %s92, 1
      %p96 = scmp.eq.s32.totalorder %s16, 1
      %p97 = scmp.ne.s32.totalorder %s92, %s94
      %p98 = scmp.eq.s32.totalorder %s16, 0
      %p99 = por %p97, %p98
      %p100 = scmp.ne.s32.totalorder %s92, %s94
      %p101 = scmp.eq.s32.totalorder %s21, 1
      %p102 = por %p100, %p101
      %p103 = scmp.ne.s32.totalorder %s94, %s95
      %p104 = scmp.eq.s32.totalorder %s21, 0
      %p105 = por %p103, %p104
      %p106 = scmp.ne.s32.totalorder %s94, %s95
      %p107 = scmp.eq.s32.totalorder %s22, 1
      %p108 = por %p106, %p107
      %p110 = scmp.ne.s32.totalorder %s95, %s109
      %p111 = scmp.eq.s32.totalorder %s22, 0
      %p112 = por %p110, %p111
      %s114 = sadd.s32 %s113, 1
      %p117 = scmp.eq.s32.totalorder %s16, 1
      %p118 = scmp.ne.s32.totalorder %s113, %s115
      %p119 = scmp.eq.s32.totalorder %s16, 0
      %p120 = por %p118, %p119
      %p121 = scmp.ne.s32.totalorder %s113, %s115
      %p122 = scmp.eq.s32.totalorder %s21, 1
      %p123 = por %p121, %p122
      %p124 = scmp.ne.s32.totalorder %s115, %s116
      %p125 = scmp.eq.s32.totalorder %s21, 0
      %p126 = por %p124, %p125
      %p127 = scmp.ne.s32.totalorder %s115, %s116
      %p128 = scmp.eq.s32.totalorder %s22, 1
      %p129 = por %p127, %p128
      %p131 = scmp.ne.s32.totalorder %s116, %s130
      %p132 = scmp.eq.s32.totalorder %s22, 0
      %p133 = por %p131, %p132
      %s135 = sadd.s32 %s134, 1
      %p138 = scmp.eq.s32.totalorder %s16, 1
      %p139 = scmp.ne.s32.totalorder %s134, %s136
      %p140 = scmp.eq.s32.totalorder %s16, 0
      %p141 = por %p139, %p140
      %p142 = scmp.ne.s32.totalorder %s134, %s136
      %p143 = scmp.eq.s32.totalorder %s21, 1
      %p144 = por %p142, %p143
      %p145 = scmp.ne.s32.totalorder %s136, %s137
      %p146 = scmp.eq.s32.totalorder %s21, 0
      %p147 = por %p145, %p146
      %p148 = scmp.ne.s32.totalorder %s136, %s137
      %p149 = scmp.eq.s32.totalorder %s22, 1
      %p150 = por %p148, %p149
      %p152 = scmp.ne.s32.totalorder %s137, %s151
      %p153 = scmp.eq.s32.totalorder %s22, 0
      %p154 = por %p152, %p153
      %s156 = sadd.s32 %s155, 1
      %p159 = scmp.eq.s32.totalorder %s16, 1
      %p160 = scmp.ne.s32.totalorder %s155, %s157
      %p161 = scmp.eq.s32.totalorder %s16, 0
      %p162 = por %p160, %p161
      %p163 = scmp.ne.s32.totalorder %s155, %s157
      %p164 = scmp.eq.s32.totalorder %s21, 1
      %p165 = por %p163, %p164
      %p166 = scmp.ne.s32.totalorder %s157, %s158
      %p167 = scmp.eq.s32.totalorder %s21, 0
      %p168 = por %p166, %p167
      %p169 = scmp.ne.s32.totalorder %s157, %s158
      %p170 = scmp.eq.s32.totalorder %s22, 1
      %p171 = por %p169, %p170
      %p173 = scmp.ne.s32.totalorder %s158, %s172
      %p174 = scmp.eq.s32.totalorder %s22, 0
      %p175 = por %p173, %p174
      %s176 = ssub.s32 %s16, %s23
      %p177 = scmp.eq.s32.totalorder %s176, 0
      %s179 = sadd.s32 %s178, 1
      %s180 = scalar_select %p177, %s178, %s179
      %p183 = pneg %p177
      %p184 = scmp.eq.s32.totalorder %s16, 1
      %p185 = por %p183, %p184
      %p186 = scmp.ne.s32.totalorder %s178, %s181
      %p187 = scmp.eq.s32.totalorder %s16, 0
      %p188 = por %p186, %p187
      %p189 = scmp.ne.s32.totalorder %s178, %s181
      %p190 = scmp.eq.s32.totalorder %s21, 1
      %p191 = por %p189, %p190
      %p192 = scmp.ne.s32.totalorder %s181, %s182
      %p193 = scmp.eq.s32.totalorder %s21, 0
      %p194 = por %p192, %p193
      %p195 = scmp.ne.s32.totalorder %s181, %s182
      %p196 = scmp.eq.s32.totalorder %s22, 1
      %p197 = por %p195, %p196
      %p199 = scmp.ne.s32.totalorder %s182, %s198
      %p200 = scmp.eq.s32.totalorder %s22, 0
      %p201 = por %p199, %p200
      %p202 = scmp.le.s32.totalorder 1, %s16
      %p203 = scmp.lt.s32.totalorder %s16, 3
      %p204 = pnand %p202, %p203
      %p205 = pneg %p204
      // Predicated region
      $region9: #{cnn_forward.1} parent=5 // pred_check
        _
      $region10: #{cnn_forward.1} parent=5 // pred_check_branch
        %207 = sbr.rel (%p204) target = $region12
      $region11: #{cnn_forward.1} parent=5 // pred_region
        %s208 = ssub.s32 %s16, 1
        // Predicated region
        $region13: #{cnn_forward.1} parent=11 // pred_check
          %p209 = pneg %p63
        $region14: #{cnn_forward.1} parent=11 // pred_check_branch
          %211 = sbr.rel (%p209) target = $region16
        $region15: #{cnn_forward.1} parent=11 // pred_region
          _
        $region16: #{cnn_forward.1} parent=11 // pred_fallthru
          _
        // Predicated region
        $region17: #{cnn_forward.1} parent=11 // pred_check
          %p212 = pneg %p84
        $region18: #{cnn_forward.1} parent=11 // pred_check_branch
          %214 = sbr.rel (%p212) target = $region20
        $region19: #{cnn_forward.1} parent=11 // pred_region
          _
        $region20: #{cnn_forward.1} parent=11 // pred_fallthru
          _
        // Predicated region
        $region21: #{cnn_forward.1} parent=11 // pred_check
          %p215 = pneg %p105
        $region22: #{cnn_forward.1} parent=11 // pred_check_branch
          %217 = sbr.rel (%p215) target = $region24
        $region23: #{cnn_forward.1} parent=11 // pred_region
          _
        $region24: #{cnn_forward.1} parent=11 // pred_fallthru
          _
        // Predicated region
        $region25: #{cnn_forward.1} parent=11 // pred_check
          %p218 = pneg %p126
        $region26: #{cnn_forward.1} parent=11 // pred_check_branch
          %220 = sbr.rel (%p218) target = $region28
        $region27: #{cnn_forward.1} parent=11 // pred_region
          _
        $region28: #{cnn_forward.1} parent=11 // pred_fallthru
          _
        // Predicated region
        $region29: #{cnn_forward.1} parent=11 // pred_check
          %p221 = pneg %p147
        $region30: #{cnn_forward.1} parent=11 // pred_check_branch
          %223 = sbr.rel (%p221) target = $region32
        $region31: #{cnn_forward.1} parent=11 // pred_region
          _
        $region32: #{cnn_forward.1} parent=11 // pred_fallthru
          _
        // Predicated region
        $region33: #{cnn_forward.1} parent=11 // pred_check
          %p224 = pneg %p168
        $region34: #{cnn_forward.1} parent=11 // pred_check_branch
          %226 = sbr.rel (%p224) target = $region36
        $region35: #{cnn_forward.1} parent=11 // pred_region
          _
        $region36: #{cnn_forward.1} parent=11 // pred_fallthru
          _
      $region12: #{cnn_forward.1} parent=5 // pred_fallthru
        _
      %p227 = scmp.lt.s32.totalorder %s16, 2
      // Predicated region
      $region37: #{cnn_forward.1} parent=5 // pred_check
        %p228 = pneg %p227
      $region38: #{cnn_forward.1} parent=5 // pred_check_branch
        %230 = sbr.rel (%p228) target = $region40
      $region39: #{cnn_forward.1} parent=5 // pred_region
        // Predicated region
        $region41: #{cnn_forward.1} parent=39 // pred_check
          %p231 = pneg %p36
        $region42: #{cnn_forward.1} parent=39 // pred_check_branch
          %233 = sbr.rel (%p231) target = $region44
        $region43: #{cnn_forward.1} parent=39 // pred_region
          %p234 = scmp.lt.s32.totalorder %s16, 1
          %s235 = scalar_select %p234, %s16, 1
          %s236 = smul.addr %s235, 2
          %s237 = smul.addr %s236, 8
          %s238 = scalar_lea.vmem %s0, %s237
        $region44: #{cnn_forward.1} parent=39 // pred_fallthru
          _
      $region40: #{cnn_forward.1} parent=5 // pred_fallthru
        _
      %p239 = scmp.le.s32.totalorder 1, %s16
      %p240 = scmp.lt.s32.totalorder %s16, 3
      %p241 = pnand %p239, %p240
      %p242 = pneg %p241
      // Predicated region
      $region45: #{cnn_forward.1} parent=5 // pred_check
        _
      $region46: #{cnn_forward.1} parent=5 // pred_check_branch
        %244 = sbr.rel (%p241) target = $region48
      $region47: #{cnn_forward.1} parent=5 // pred_region
        %s245 = ssub.s32 %s16, 1
        %p246 = scmp.lt.s32.totalorder %s21, 1
        %s247 = scalar_select %p246, %s21, 1
        %s248 = smul.addr %s247, 2
        %s249 = smul.addr %s248, 8
        %s250 = scalar_lea.vmem %s0, %s249
        %p251 = pneg %p42
        %p252 = pneg %p39
        %p253 = pneg %p63
        %p254 = pneg %p60
        %p255 = pneg %p84
        %p256 = pneg %p81
        %p257 = pneg %p105
        %p258 = pneg %p102
        %p259 = pneg %p126
        %p260 = pneg %p123
        %p261 = pneg %p147
        %p262 = pneg %p144
        %p263 = pneg %p168
        %p264 = pneg %p165
        %p265 = pneg %p194
        %p266 = pneg %p191
        %s267 = sand.u32 %s181, 1
        %s268 = scalar_lea.sflag [#allocation3], %s267
        %s269 = sand.u32 %s181, 1
        %s270 = scalar_lea.vmem [#allocation2], %s269
        %p271 = scmp.lt.s32.totalorder %s21, 1
        %s272 = scalar_select %p271, %s21, 1
        %s273 = smul.addr %s272, 2
        %s274 = smul.addr %s273, 8
        %s275 = scalar_lea.vmem %s0, %s274
        %v277 = vld [vmem:[%s275] sm:$0x7f]
        %s278 = scalar_lea.vmem %s275, 8
        %v279 = vld [vmem:[%s278] sm:$0x7f]
        %v280 = vld [vmem:[%s275 + $0x1] sm:$0x7f]
        %v281 = vld [vmem:[%s278 + $0x1] sm:$0x7f]
        %283 = vrot.lane.b32.xlu0 %v279, 64
        %v284 = vpop.permute.xlu0 %283
        %vm286 = vcmask 523264
        %v287 = vsel %vm286, %v277, %v284
        %v288 = vpack.c.bf16 %v287, %v287
        %v289 = vpack.c.bf16 %v280, %v280
        %291 = vrot.lane.b32.xlu0 %v280, 64
        %v292 = vpop.permute.xlu0 %291
        %v294 = vsel %vm286, %v279, %v292
        %v295 = vpack.c.bf16 %v294, %v294
        %v296 = vpack.c.bf16 %v281, %v281
        %v297 = vld [vmem:[%s1] sm:$0xf]
        %v298 = vld [vmem:[%s1 + $0x4] sm:$0xf]
        %v299 = vld [vmem:[%s1 + $0x8] sm:$0xf]
        %v300 = vld [vmem:[%s1 + $0xc] sm:$0xf]
        %v301 = vld [vmem:[%s1 + $0x10] sm:$0xf]
        %v302 = vld [vmem:[%s1 + $0x14] sm:$0xf]
        %v303 = vld [vmem:[%s1 + $0x18] sm:$0xf]
        %v304 = vld [vmem:[%s1 + $0x1c] sm:$0xf]
        %v305 = vld [vmem:[%s1 + $0x20] sm:$0xf]
        %v306 = vld [vmem:[%s1 + $0x24] sm:$0xf]
        %v307 = vld [vmem:[%s1 + $0x28] sm:$0xf]
        %v308 = vld [vmem:[%s1 + $0x2c] sm:$0xf]
        %v309 = vld [vmem:[%s1 + $0x30] sm:$0xf]
        %v310 = vld [vmem:[%s1 + $0x34] sm:$0xf]
        %v311 = vld [vmem:[%s1 + $0x38] sm:$0xf]
        %v312 = vld [vmem:[%s1 + $0x3c] sm:$0xf]
        %v313 = vld [vmem:[%s1 + $0x40] sm:$0xf]
        %v314 = vld [vmem:[%s1 + $0x44] sm:$0xf]
        %v315 = vld [vmem:[%s1 + $0x48] sm:$0xf]
        %v316 = vld [vmem:[%s1 + $0x4c] sm:$0xf]
        %v317 = vld [vmem:[%s1 + $0x50] sm:$0xf]
        %v318 = vld [vmem:[%s1 + $0x54] sm:$0xf]
        %v319 = vld [vmem:[%s1 + $0x58] sm:$0xf]
        %v320 = vld [vmem:[%s1 + $0x5c] sm:$0xf]
        %v345 = vunpack.c.l.b16 %v297
        %v346 = vunpack.c.l.b16 %v298
        %v347 = vunpack.c.l.b16 %v299
        %v348 = vunpack.c.l.b16 %v300
        %v349 = vunpack.c.l.b16 %v301
        %v350 = vunpack.c.l.b16 %v302
        %v351 = vunpack.c.l.b16 %v303
        %v352 = vunpack.c.l.b16 %v304
        %v353 = vunpack.c.l.b16 %v305
        %v354 = vunpack.c.l.b16 %v306
        %v355 = vunpack.c.l.b16 %v307
        %v356 = vunpack.c.l.b16 %v308
        %v357 = vunpack.c.l.b16 %v309
        %v358 = vunpack.c.l.b16 %v310
        %v359 = vunpack.c.l.b16 %v311
        %v360 = vunpack.c.l.b16 %v312
        %v361 = vunpack.c.l.b16 %v313
        %v362 = vunpack.c.l.b16 %v314
        %v363 = vunpack.c.l.b16 %v315
        %v364 = vunpack.c.l.b16 %v316
        %v365 = vunpack.c.l.b16 %v317
        %v366 = vunpack.c.l.b16 %v318
        %v367 = vunpack.c.l.b16 %v319
        %v368 = vunpack.c.l.b16 %v320
        %v369 = vpack.c.b16 %v346, %v345
        %v370 = vpack.c.b16 %v348, %v347
        %v371 = vpack.c.b16 %v350, %v349
        %v372 = vpack.c.b16 %v352, %v351
        %v373 = vpack.c.b16 %v354, %v353
        %v374 = vpack.c.b16 %v356, %v355
        %v375 = vpack.c.b16 %v358, %v357
        %v376 = vpack.c.b16 %v360, %v359
        %v377 = vpack.c.b16 %v362, %v361
        %v378 = vpack.c.b16 %v364, %v363
        %v379 = vpack.c.b16 %v366, %v365
        %v380 = vpack.c.b16 %v368, %v367
        %v394 = vsel %vm286, %v289, 0
        %396 = vmatprep.subr.bf16.mxu0 0
        %397 = vmatpush1.bf16.msra.mxu0 %v376
        %398 = vmatprep.subr.bf16.mxu0 0
        %399 = vmatpush1.bf16.msra.mxu0 %v375
        %400 = vmatprep.subr.bf16.mxu0 0
        %401 = vmatpush1.bf16.msra.mxu0 %v374
        %402 = vmatprep.subr.bf16.mxu0 0
        %403 = vmatpush1.bf16.msra.mxu0 %v373
        %404 = vmatprep.subr.bf16.mxu0 0
        %405 = vmatpush1.bf16.msra.mxu0 %v372
        %406 = vmatprep.subr.bf16.mxu0 0
        %407 = vmatpush1.bf16.msra.mxu0 %v371
        %408 = vmatprep.subr.bf16.mxu0 0
        %409 = vmatpush1.bf16.msra.mxu0 %v370
        %410 = vmatprep.subr.bf16.mxu0 0
        %411 = vmatpush1.bf16.msra.mxu0 %v369
        %412 = vmatprep.subr.bf16.mxu0 0
        %413 = vmatpush2.bf16.msra.mxu0 0
        %414 = vmatprep.subr.bf16.mxu0 0
        %415 = vmatpush2.bf16.msra.mxu0 0
        %416 = vmatprep.subr.bf16.mxu0 0
        %417 = vmatpush2.bf16.msra.mxu0 0
        %418 = vmatprep.subr.bf16.mxu0 0
        %419 = vmatpush2.bf16.msra.mxu0 0
        %420 = vmatprep.subr.bf16.mxu0 0
        %421 = vmatpush2.bf16.msra.mxu0 %v380
        %422 = vmatprep.subr.bf16.mxu0 0
        %423 = vmatpush2.bf16.msra.mxu0 %v379
        %424 = vmatprep.subr.bf16.mxu0 0
        %425 = vmatpush2.bf16.msra.mxu0 %v378
        %426 = vmatprep.subr.bf16.mxu0 0
        %427 = vmatpush2.bf16.msra.mxu0 %v377
        %428 = vmatprep.mubr.bf16.mxu0 %v394
        %429 = vmatmul.mubr.bf16.gmra.mxu0 %v288
        %v430 = vpop.f32.mrf.mxu0
        %v431 = vadd.f32 0.0, %v430
        %v432 = vpop.f32.mrf.mxu0
        %v433 = vpop.f32.mrf.mxu0
        %v434 = vpop.f32.mrf.mxu0
        %435 = vdwg.mxu0
        %v437 = vsel %vm286, %v296, 0
        %439 = vmatprep.subr.bf16.mxu0 0
        %440 = vmatpush1.bf16.msra.mxu0 %v376
        %441 = vmatprep.subr.bf16.mxu0 0
        %442 = vmatpush1.bf16.msra.mxu0 %v375
        %443 = vmatprep.subr.bf16.mxu0 0
        %444 = vmatpush1.bf16.msra.mxu0 %v374
        %445 = vmatprep.subr.bf16.mxu0 0
        %446 = vmatpush1.bf16.msra.mxu0 %v373
        %447 = vmatprep.subr.bf16.mxu0 0
        %448 = vmatpush1.bf16.msra.mxu0 %v372
        %449 = vmatprep.subr.bf16.mxu0 0
        %450 = vmatpush1.bf16.msra.mxu0 %v371
        %451 = vmatprep.subr.bf16.mxu0 0
        %452 = vmatpush1.bf16.msra.mxu0 %v370
        %453 = vmatprep.subr.bf16.mxu0 0
        %454 = vmatpush1.bf16.msra.mxu0 %v369
        %455 = vmatprep.subr.bf16.mxu0 0
        %456 = vmatpush2.bf16.msra.mxu0 0
        %457 = vmatprep.subr.bf16.mxu0 0
        %458 = vmatpush2.bf16.msra.mxu0 0
        %459 = vmatprep.subr.bf16.mxu0 0
        %460 = vmatpush2.bf16.msra.mxu0 0
        %461 = vmatprep.subr.bf16.mxu0 0
        %462 = vmatpush2.bf16.msra.mxu0 0
        %463 = vmatprep.subr.bf16.mxu0 0
        %464 = vmatpush2.bf16.msra.mxu0 %v380
        %465 = vmatprep.subr.bf16.mxu0 0
        %466 = vmatpush2.bf16.msra.mxu0 %v379
        %467 = vmatprep.subr.bf16.mxu0 0
        %468 = vmatpush2.bf16.msra.mxu0 %v378
        %469 = vmatprep.subr.bf16.mxu0 0
        %470 = vmatpush2.bf16.msra.mxu0 %v377
        %471 = vmatprep.mubr.bf16.mxu0 %v437
        %472 = vmatmul.mubr.bf16.gmra.mxu0 %v295
        %v473 = vpop.f32.mrf.mxu0
        %v474 = vadd.f32 0.0, %v473
        %v475 = vpop.f32.mrf.mxu0
        %v476 = vpop.f32.mrf.mxu0
        %v477 = vpop.f32.mrf.mxu0
        %478 = vdwg.mxu0
        %v479 = vmax.f32 %v431, %v474
        %481 = vrot.lane.b32.xlu0 %v479, 86
        %v482 = vpop.permute.xlu0 %481
        %v484 = vmax.f32 %v479, %v482
        %v485 = vld [vmem:[%s6] sm:$0x1]
        %v486 = vlaneseq
        %v487 = vshrl.u32 %v486, 7
        %v488 = vsub.s32 0, %v487
        %v489 = vrot.slane %v485, %v488
        %v490 = vadd.f32 %v484, %v489
        %v491 = vmax.f32 %v490, 0.0
        %v493 = vrot.slane %v491, 1
        %494 = vrot.lane.b32.xlu0 %v493, 42
        %v495 = vpop.permute.xlu0 %494
        %v497 = vrot.slane %v491, 2
        %498 = vrot.lane.b32.xlu0 %v497, 84
        %v499 = vpop.permute.xlu0 %498
        %vm501 = vcmask 343040
        %v502 = vsel %vm501, %v491, %v495
        %vm503 = vcmask 687104
        %v504 = vsel %vm503, %v502, %v499
        %v505 = vpack.c.bf16 %v504, %v504
        %v506 = vld [vmem:[%s2] sm:$0xf]
        %v507 = vld [vmem:[%s2 + $0x4] sm:$0xf]
        %v508 = vld [vmem:[%s2 + $0x8] sm:$0xf]
        %v509 = vld [vmem:[%s2 + $0xc] sm:$0xf]
        %v510 = vld [vmem:[%s2 + $0x10] sm:$0xf]
        %v511 = vld [vmem:[%s2 + $0x14] sm:$0xf]
        %v512 = vld [vmem:[%s2 + $0x18] sm:$0xf]
        %v513 = vld [vmem:[%s2 + $0x1c] sm:$0xf]
        %v514 = vld [vmem:[%s2 + $0x20] sm:$0xf]
        %v515 = vld [vmem:[%s2 + $0x24] sm:$0xf]
        %v516 = vld [vmem:[%s2 + $0x28] sm:$0xf]
        %v517 = vld [vmem:[%s2 + $0x2c] sm:$0xf]
        %v518 = vld [vmem:[%s2 + $0x30] sm:$0xf]
        %v519 = vld [vmem:[%s2 + $0x34] sm:$0xf]
        %v520 = vld [vmem:[%s2 + $0x38] sm:$0xf]
        %v521 = vld [vmem:[%s2 + $0x3c] sm:$0x7]
        %v538 = vunpack.c.l.b16 %v506
        %v539 = vunpack.c.l.b16 %v507
        %v540 = vunpack.c.l.b16 %v508
        %v541 = vunpack.c.l.b16 %v509
        %v542 = vunpack.c.l.b16 %v510
        %v543 = vunpack.c.l.b16 %v511
        %v544 = vunpack.c.l.b16 %v512
        %v545 = vunpack.c.l.b16 %v513
        %v546 = vunpack.c.l.b16 %v514
        %v547 = vunpack.c.l.b16 %v515
        %v548 = vunpack.c.l.b16 %v516
        %v549 = vunpack.c.l.b16 %v517
        %v550 = vunpack.c.l.b16 %v518
        %v551 = vunpack.c.l.b16 %v519
        %v552 = vunpack.c.l.b16 %v520
        %v553 = vunpack.c.l.b16 %v521
        %v554 = vpack.c.b16 %v539, %v538
        %v555 = vpack.c.b16 %v541, %v540
        %v556 = vpack.c.b16 %v543, %v542
        %v557 = vpack.c.b16 %v545, %v544
        %v558 = vpack.c.b16 %v547, %v546
        %v559 = vpack.c.b16 %v549, %v548
        %v560 = vpack.c.b16 %v551, %v550
        %v561 = vpack.c.b16 %v553, %v552
        %vm569 = vcmask 1031168
        %v571 = vsel %vm569, %v505, 0
        %vm573 = vcmask 1046528
        %v575 = vsel %vm573, %v561, 0
        %577 = vmatprep.subr.bf16.mxu0 0
        %578 = vmatpush1.bf16.msra.mxu0 %v575
        %579 = vmatprep.subr.bf16.mxu0 0
        %580 = vmatpush1.bf16.msra.mxu0 %v560
        %581 = vmatprep.subr.bf16.mxu0 0
        %582 = vmatpush1.bf16.msra.mxu0 %v559
        %583 = vmatprep.subr.bf16.mxu0 0
        %584 = vmatpush1.bf16.msra.mxu0 %v558
        %585 = vmatprep.subr.bf16.mxu0 0
        %586 = vmatpush1.bf16.msra.mxu0 %v557
        %587 = vmatprep.subr.bf16.mxu0 0
        %588 = vmatpush1.bf16.msra.mxu0 %v556
        %589 = vmatprep.subr.bf16.mxu0 0
        %590 = vmatpush1.bf16.msra.mxu0 %v555
        %591 = vmatprep.subr.bf16.mxu0 0
        %592 = vmatpush1.bf16.msra.mxu0 %v554
        %593 = vmatprep.subr.bf16.mxu0 0
        %594 = vmatpush2.bf16.msra.mxu0 0
        %595 = vmatprep.subr.bf16.mxu0 0
        %596 = vmatpush2.bf16.msra.mxu0 0
        %597 = vmatprep.subr.bf16.mxu0 0
        %598 = vmatpush2.bf16.msra.mxu0 0
        %599 = vmatprep.subr.bf16.mxu0 0
        %600 = vmatpush2.bf16.msra.mxu0 0
        %601 = vmatprep.subr.bf16.mxu0 0
        %602 = vmatpush2.bf16.msra.mxu0 0
        %603 = vmatprep.subr.bf16.mxu0 0
        %604 = vmatpush2.bf16.msra.mxu0 0
        %605 = vmatprep.subr.bf16.mxu0 0
        %606 = vmatpush2.bf16.msra.mxu0 0
        %607 = vmatprep.subr.bf16.mxu0 0
        %608 = vmatpush2.bf16.msra.mxu0 0
        %609 = vmatprep.mubr.bf16.mxu0 0
        %610 = vmatmul.mubr.bf16.gmra.mxu0 %v571
        %v611 = vpop.f32.mrf.mxu0
        %v612 = vadd.f32 0.0, %v611
        %v613 = vpop.f32.mrf.mxu0
        %v614 = vpop.f32.mrf.mxu0
        %v615 = vpop.f32.mrf.mxu0
        %616 = vdwg.mxu0
        %v618 = vrot.slane %v612, 1
        %v620 = vmax.f32 %v612, %v618
        %v622 = vrot.slane %v620, 1
        %vm624 = vcmask 1040384
        %v625 = vsel %vm624, %v620, %v622
        %627 = vrot.lane.b32.xlu0 %v625, 88
        %v628 = vpop.permute.xlu0 %627
        %v630 = vmax.f32 %v625, %v628
        %v631 = vld [vmem:[%s6 + $0x1] sm:$0x1]
        %v632 = vlaneseq
        %v633 = vshrl.u32 %v632, 7
        %v634 = vsub.s32 0, %v633
        %v635 = vrot.slane %v631, %v634
        %v636 = vadd.f32 %v630, %v635
        %v637 = vmax.f32 %v636, 0.0
        %v639 = vrot.slane %v637, 1
        %640 = vrot.lane.b32.xlu0 %v639, 40
        %v641 = vpop.permute.xlu0 %640
        %vm643 = vcmask 326656
        %v644 = vsel %vm643, %v637, %v641
        %v645 = vpack.c.bf16 %v644, %v644
        %v646 = vld [vmem:[%s3] sm:$0xf]
        %v647 = vld [vmem:[%s3 + $0x4] sm:$0xf]
        %v648 = vld [vmem:[%s3 + $0x8] sm:$0xf]
        %v649 = vld [vmem:[%s3 + $0xc] sm:$0xf]
        %v650 = vld [vmem:[%s3 + $0x10] sm:$0xf]
        %v651 = vld [vmem:[%s3 + $0x14] sm:$0xf]
        %v652 = vld [vmem:[%s3 + $0x18] sm:$0xf]
        %v653 = vld [vmem:[%s3 + $0x1c] sm:$0xf]
        %v654 = vld [vmem:[%s3 + $0x20] sm:$0xf]
        %v655 = vld [vmem:[%s3 + $0x24] sm:$0xf]
        %v656 = vld [vmem:[%s6 + $0x2] sm:$0x1]
        %v667 = vunpack.c.l.b16 %v646
        %v668 = vunpack.c.l.b16 %v647
        %v669 = vunpack.c.l.b16 %v648
        %v670 = vunpack.c.l.b16 %v649
        %v671 = vunpack.c.l.b16 %v650
        %v672 = vunpack.c.l.b16 %v651
        %v673 = vunpack.c.l.b16 %v652
        %v674 = vunpack.c.l.b16 %v653
        %v675 = vunpack.c.l.b16 %v654
        %v676 = vunpack.c.l.b16 %v655
        %v677 = vpack.c.b16 %v668, %v667
        %v678 = vpack.c.b16 %v670, %v669
        %v679 = vpack.c.b16 %v672, %v671
        %v680 = vpack.c.b16 %v674, %v673
        %v681 = vpack.c.b16 %v676, %v675
        %vm687 = vcmask 654336
        %v689 = vsel %vm687, %v645, 0
        %691 = vmatprep.subr.bf16.mxu0 0
        %692 = vmatpush1.bf16.msra.mxu0 0
        %693 = vmatprep.subr.bf16.mxu0 0
        %694 = vmatpush1.bf16.msra.mxu0 0
        %695 = vmatprep.subr.bf16.mxu0 0
        %696 = vmatpush1.bf16.msra.mxu0 0
        %697 = vmatprep.subr.bf16.mxu0 0
        %698 = vmatpush1.bf16.msra.mxu0 %v681
        %699 = vmatprep.subr.bf16.mxu0 0
        %700 = vmatpush1.bf16.msra.mxu0 %v680
        %701 = vmatprep.subr.bf16.mxu0 0
        %702 = vmatpush1.bf16.msra.mxu0 %v679
        %703 = vmatprep.subr.bf16.mxu0 0
        %704 = vmatpush1.bf16.msra.mxu0 %v678
        %705 = vmatprep.subr.bf16.mxu0 0
        %706 = vmatpush1.bf16.msra.mxu0 %v677
        %707 = vmatprep.subr.bf16.mxu0 0
        %708 = vmatpush2.bf16.msra.mxu0 0
        %709 = vmatprep.subr.bf16.mxu0 0
        %710 = vmatpush2.bf16.msra.mxu0 0
        %711 = vmatprep.subr.bf16.mxu0 0
        %712 = vmatpush2.bf16.msra.mxu0 0
        %713 = vmatprep.subr.bf16.mxu0 0
        %714 = vmatpush2.bf16.msra.mxu0 0
        %715 = vmatprep.subr.bf16.mxu0 0
        %716 = vmatpush2.bf16.msra.mxu0 0
        %717 = vmatprep.subr.bf16.mxu0 0
        %718 = vmatpush2.bf16.msra.mxu0 0
        %719 = vmatprep.subr.bf16.mxu0 0
        %720 = vmatpush2.bf16.msra.mxu0 0
        %721 = vmatprep.subr.bf16.mxu0 0
        %722 = vmatpush2.bf16.msra.mxu0 0
        %723 = vmatprep.mubr.bf16.mxu0 0
        %724 = vmatmul.mubr.bf16.gmra.mxu0 %v689
        %v725 = vpop.f32.mrf.mxu0
        %v726 = vadd.f32 %v656, %v725
        %v727 = vpop.f32.mrf.mxu0
        %v728 = vpop.f32.mrf.mxu0
        %v729 = vpop.f32.mrf.mxu0
        %730 = vdwg.mxu0
        %v731 = vmax.f32 %v726, 0.0
        %v732 = vpack.c.bf16 %v731, %v731
        %v733 = vld [vmem:[%s4] sm:$0xf]
        %v734 = vld [vmem:[%s4 + $0x4] sm:$0xf]
        %v735 = vld [vmem:[%s4 + $0x8] sm:$0xf]
        %v736 = vld [vmem:[%s4 + $0xc] sm:$0xf]
        %v737 = vld [vmem:[%s4 + $0x10] sm:$0xf]
        %v738 = vld [vmem:[%s4 + $0x14] sm:$0xf]
        %v739 = vld [vmem:[%s4 + $0x18] sm:$0xf]
        %v740 = vld [vmem:[%s4 + $0x1c] sm:$0xf]
        %v741 = vld [vmem:[%s4 + $0x20] sm:$0xf]
        %v742 = vld [vmem:[%s4 + $0x24] sm:$0xf]
        %v743 = vld [vmem:[%s4 + $0x28] sm:$0xf]
        %v744 = vld [vmem:[%s4 + $0x2c] sm:$0xf]
        %v745 = vld [vmem:[%s4 + $0x30] sm:$0xf]
        %v746 = vld [vmem:[%s4 + $0x34] sm:$0xf]
        %v747 = vld [vmem:[%s4 + $0x38] sm:$0xf]
        %v748 = vld [vmem:[%s6 + $0x3] sm:$0x1]
        %v764 = vunpack.c.l.b16 %v733
        %v765 = vunpack.c.l.b16 %v734
        %v766 = vunpack.c.l.b16 %v735
        %v767 = vunpack.c.l.b16 %v736
        %v768 = vunpack.c.l.b16 %v737
        %v769 = vunpack.c.l.b16 %v738
        %v770 = vunpack.c.l.b16 %v739
        %v771 = vunpack.c.l.b16 %v740
        %v772 = vunpack.c.l.b16 %v741
        %v773 = vunpack.c.l.b16 %v742
        %v774 = vunpack.c.l.b16 %v743
        %v775 = vunpack.c.l.b16 %v744
        %v776 = vunpack.c.l.b16 %v745
        %v777 = vunpack.c.l.b16 %v746
        %v778 = vunpack.c.l.b16 %v747
        %v779 = vpack.c.b16 %v765, %v764
        %v780 = vpack.c.b16 %v767, %v766
        %v781 = vpack.c.b16 %v769, %v768
        %v782 = vpack.c.b16 %v771, %v770
        %v783 = vpack.c.b16 %v773, %v772
        %v784 = vpack.c.b16 %v775, %v774
        %v785 = vpack.c.b16 %v777, %v776
        %v786 = vpack.c.b16 %v778, %v778
        %vm794 = vcmask 982016
        %v796 = vsel %vm794, %v732, 0
        %vm798 = vcmask 1043456
        %v800 = vsel %vm798, %v786, 0
        %802 = vmatprep.subr.bf16.mxu0 0
        %803 = vmatpush1.bf16.msra.mxu0 %v800
        %804 = vmatprep.subr.bf16.mxu0 0
        %805 = vmatpush1.bf16.msra.mxu0 %v785
        %806 = vmatprep.subr.bf16.mxu0 0
        %807 = vmatpush1.bf16.msra.mxu0 %v784
        %808 = vmatprep.subr.bf16.mxu0 0
        %809 = vmatpush1.bf16.msra.mxu0 %v783
        %810 = vmatprep.subr.bf16.mxu0 0
        %811 = vmatpush1.bf16.msra.mxu0 %v782
        %812 = vmatprep.subr.bf16.mxu0 0
        %813 = vmatpush1.bf16.msra.mxu0 %v781
        %814 = vmatprep.subr.bf16.mxu0 0
        %815 = vmatpush1.bf16.msra.mxu0 %v780
        %816 = vmatprep.subr.bf16.mxu0 0
        %817 = vmatpush1.bf16.msra.mxu0 %v779
        %818 = vmatprep.subr.bf16.mxu0 0
        %819 = vmatpush2.bf16.msra.mxu0 0
        %820 = vmatprep.subr.bf16.mxu0 0
        %821 = vmatpush2.bf16.msra.mxu0 0
        %822 = vmatprep.subr.bf16.mxu0 0
        %823 = vmatpush2.bf16.msra.mxu0 0
        %824 = vmatprep.subr.bf16.mxu0 0
        %825 = vmatpush2.bf16.msra.mxu0 0
        %826 = vmatprep.subr.bf16.mxu0 0
        %827 = vmatpush2.bf16.msra.mxu0 0
        %828 = vmatprep.subr.bf16.mxu0 0
        %829 = vmatpush2.bf16.msra.mxu0 0
        %830 = vmatprep.subr.bf16.mxu0 0
        %831 = vmatpush2.bf16.msra.mxu0 0
        %832 = vmatprep.subr.bf16.mxu0 0
        %833 = vmatpush2.bf16.msra.mxu0 0
        %834 = vmatprep.mubr.bf16.mxu0 0
        %835 = vmatmul.mubr.bf16.gmra.mxu0 %v796
        %v836 = vpop.f32.mrf.mxu0
        %v837 = vadd.f32 %v748, %v836
        %v838 = vpop.f32.mrf.mxu0
        %v839 = vpop.f32.mrf.mxu0
        %v840 = vpop.f32.mrf.mxu0
        %841 = vdwg.mxu0
        %v842 = vmax.f32 %v837, 0.0
        %v843 = vpack.c.bf16 %v842, %v842
        %v844 = vld [vmem:[%s5] sm:$0xf]
        %v845 = vld [vmem:[%s5 + $0x4] sm:$0xf]
        %v846 = vld [vmem:[%s5 + $0x8] sm:$0xf]
        %v847 = vld [vmem:[%s5 + $0xc] sm:$0xf]
        %v848 = vld [vmem:[%s5 + $0x10] sm:$0xf]
        %v849 = vld [vmem:[%s5 + $0x14] sm:$0xf]
        %v850 = vld [vmem:[%s5 + $0x18] sm:$0xf]
        %v851 = vld [vmem:[%s5 + $0x1c] sm:$0xf]
        %v852 = vld [vmem:[%s5 + $0x20] sm:$0xf]
        %v853 = vld [vmem:[%s5 + $0x24] sm:$0xf]
        %v854 = vld [vmem:[%s5 + $0x28] sm:$0x3]
        %v855 = vld [vmem:[%s6 + $0x4] sm:$0x1]
        %v867 = vunpack.c.l.b16 %v844
        %v868 = vunpack.c.l.b16 %v845
        %v869 = vunpack.c.l.b16 %v846
        %v870 = vunpack.c.l.b16 %v847
        %v871 = vunpack.c.l.b16 %v848
        %v872 = vunpack.c.l.b16 %v849
        %v873 = vunpack.c.l.b16 %v850
        %v874 = vunpack.c.l.b16 %v851
        %v875 = vunpack.c.l.b16 %v852
        %v876 = vunpack.c.l.b16 %v853
        %v877 = vunpack.c.l.b16 %v854
        %v878 = vpack.c.b16 %v868, %v867
        %v879 = vpack.c.b16 %v870, %v869
        %v880 = vpack.c.b16 %v872, %v871
        %v881 = vpack.c.b16 %v874, %v873
        %v882 = vpack.c.b16 %v876, %v875
        %v883 = vpack.c.b16 %v877, %v877
        %v890 = vsel %vm503, %v843, 0
        %vm892 = vcmask 1041408
        %v894 = vsel %vm892, %v883, 0
        %896 = vmatprep.subr.bf16.mxu0 0
        %897 = vmatpush1.bf16.msra.mxu0 0
        %898 = vmatprep.subr.bf16.mxu0 0
        %899 = vmatpush1.bf16.msra.mxu0 0
        %900 = vmatprep.subr.bf16.mxu0 0
        %901 = vmatpush1.bf16.msra.mxu0 %v894
        %902 = vmatprep.subr.bf16.mxu0 0
        %903 = vmatpush1.bf16.msra.mxu0 %v882
        %904 = vmatprep.subr.bf16.mxu0 0
        %905 = vmatpush1.bf16.msra.mxu0 %v881
        %906 = vmatprep.subr.bf16.mxu0 0
        %907 = vmatpush1.bf16.msra.mxu0 %v880
        %908 = vmatprep.subr.bf16.mxu0 0
        %909 = vmatpush1.bf16.msra.mxu0 %v879
        %910 = vmatprep.subr.bf16.mxu0 0
        %911 = vmatpush1.bf16.msra.mxu0 %v878
        %912 = vmatprep.subr.bf16.mxu0 0
        %913 = vmatpush2.bf16.msra.mxu0 0
        %914 = vmatprep.subr.bf16.mxu0 0
        %915 = vmatpush2.bf16.msra.mxu0 0
        %916 = vmatprep.subr.bf16.mxu0 0
        %917 = vmatpush2.bf16.msra.mxu0 0
        %918 = vmatprep.subr.bf16.mxu0 0
        %919 = vmatpush2.bf16.msra.mxu0 0
        %920 = vmatprep.subr.bf16.mxu0 0
        %921 = vmatpush2.bf16.msra.mxu0 0
        %922 = vmatprep.subr.bf16.mxu0 0
        %923 = vmatpush2.bf16.msra.mxu0 0
        %924 = vmatprep.subr.bf16.mxu0 0
        %925 = vmatpush2.bf16.msra.mxu0 0
        %926 = vmatprep.subr.bf16.mxu0 0
        %927 = vmatpush2.bf16.msra.mxu0 0
        %928 = vmatprep.mubr.bf16.mxu0 0
        %929 = vmatmul.mubr.bf16.gmra.mxu0 %v890
        %v930 = vpop.f32.mrf.mxu0
        %v931 = vadd.f32 %v855, %v930
        %v932 = vpop.f32.mrf.mxu0
        %v933 = vpop.f32.mrf.mxu0
        %v934 = vpop.f32.mrf.mxu0
        %935 = vdwg.mxu0
        %vm936 = vcmask 73728
        %v937 = vsel %vm936, %v931, -inf
        %938 = vmax.xlane.f32.xlu0 %v937
        %v939 = vpop.xlane.xlu0 %938
        %v940 = vsub.f32 %v931, %v939
        %v941 = vmul.f32 %v940, 1.442695
        %v942 = vpow.pop %v941
        %v943 = vsel %vm936, %v942, 0.0
        %944 = vadd.xlane.f32.xlu0 %v943
        %v945 = vpop.xlane.xlu0 %944
        %v946 = vrcp.pop %v945
        %v947 = vmul.f32 %v942, %v946
        %948 = vst.msk [vmem:[%s270] sm:$0x1] %vm936, %v947
        %s949 = sand.u32 %s181, 1
        %s950 = scalar_lea.sflag [#allocation3], %s949
        %s951 = sand.u32 %s181, 1
        %s952 = scalar_lea.vmem [#allocation2], %s951
        // Predicated region
        $region49: #{cnn_forward.1} parent=47 // pred_check
          %p953 = pneg %p191
        $region50: #{cnn_forward.1} parent=47 // pred_check_branch
          %955 = sbr.rel (%p953) target = $region52
        $region51: #{cnn_forward.1} parent=47 // pred_region
          %s957 = ssub.s32 16, 16
          %958 = vsyncadd %s950, %s957
          %s959 = smul.addr %s21, 16
          %s960 = scalar_lea.hbm %s7, %s959
          %s962 = sshll.u32 %s952, 4
          %s963 = int_to_ptr.vmem [resolvable:$true] %s962
          %965 = dma.vmem_to_hbm [thread:$0]  %s963, 16, %s960, %s950
        $region52: #{cnn_forward.1} parent=47 // pred_fallthru
          _
      $region48: #{cnn_forward.1} parent=5 // pred_fallthru
        _
      %p966 = scmp.le.s32.totalorder 2, %s16
      // Predicated region
      $region53: #{cnn_forward.1} parent=5 // pred_check
        %p967 = pneg %p966
      $region54: #{cnn_forward.1} parent=5 // pred_check_branch
        %969 = sbr.rel (%p967) target = $region56
      $region55: #{cnn_forward.1} parent=5 // pred_region
        %s970 = ssub.s32 %s16, 2
        // Predicated region
        $region57: #{cnn_forward.1} parent=55 // pred_check
          %p971 = pneg %p197
        $region58: #{cnn_forward.1} parent=55 // pred_check_branch
          %973 = sbr.rel (%p971) target = $region60
        $region59: #{cnn_forward.1} parent=55 // pred_region
          %s974 = sand.u32 %s182, 1
          %s975 = scalar_lea.sflag [#allocation3], %s974
          %s976 = sand.u32 %s182, 1
          %s977 = scalar_lea.vmem [#allocation2], %s976
          %978 = dma.done %s975, 16
        $region60: #{cnn_forward.1} parent=55 // pred_fallthru
          _
      $region56: #{cnn_forward.1} parent=5 // pred_fallthru
        _
    $region6: #{cnn_forward.1} parent=1 // loop_footer
      %s20 = sadd.s32 1, %s16
    $region7: #{cnn_forward.1} parent=1 // loop_footer_branch
      %15 = sbr.rel target = $region3
    $region8: #{cnn_forward.1} parent=1 // loop_exit
      _
    %979 = vsyncpa [#allocation3], 1
    %s980 = scalar_lea.sflag [#allocation3], 1
    %981 = vsyncpa %s980, 1

</llo_original>
